<compile_context>
chip_gen: v5e
topology: v5e:2x2
jax: 0.10.0
libtpu: 0.0.40
codegen_flags: <defaults>
</compile_context>

<pallas_src>
import jax
import jax.numpy as jnp
from jax.experimental import pallas as pl
from jax.experimental.pallas import tpu as pltpu


def _cdiv(a, b):
    return -(-a // b)


def _round_up(a, b):
    return _cdiv(a, b) * b


def _physical_vmem_bytes():
    try:
        return int(pltpu.get_tpu_info().vmem_capacity_bytes)
    except Exception:
        return 64 << 20  # conservative: v7x per-TensorCore VMEM


def _choose_tiles(rows, cols, itemsize, target_bytes, min_blocks=8,
                  min_tile_bytes=256 * 1024):
    """Pick (row_tile, lane_tile) aiming at ~target_bytes per input tile."""
    sub = max(8, 32 // itemsize)              # native sublane tile: 8 f32, 16 bf16, 32 int8
    lane_tileable = (cols % 128 == 0) and cols > 128

    # Lane (last-dim) tile: full width if one sublane-row block fits the target,
    # otherwise a multiple of 128 sized to ~target_bytes.
    if not lane_tileable or cols * sub * itemsize <= target_bytes:
        tc = cols
    else:
        tc = max(128, min(cols, (target_bytes // (sub * itemsize)) // 128 * 128))

    # Row tile: multiple of the native sublane tile (or the full dim if smaller).
    if rows <= sub:
        tr = rows
    else:
        tr = max(sub, min(rows, target_bytes // (tc * itemsize)) // sub * sub)

    def n_blocks(r, c):
        return _cdiv(rows, r) * _cdiv(cols, c)

    # Give the pipeline (and v7x's two TensorCores) several steps on medium/large
    # inputs, but never shrink below ~min_tile_bytes per tile.
    while n_blocks(tr, tc) < min_blocks and tr > sub:
        cand = max(sub, (tr // 2) // sub * sub)
        if cand == tr or cand * tc * itemsize < min_tile_bytes:
            break
        tr = cand
    while n_blocks(tr, tc) < min_blocks and lane_tileable and tc > 128:
        cand = max(128, (tc // 2) // 128 * 128)
        if cand == tc or tr * cand * itemsize < min_tile_bytes:
            break
        tc = cand
    return tr, tc


def _norm_rowstats_kernel(ss_ref, img_ref, out_ref):
    # ss_ref: (tr, 2) f32 -> per-row [scale, shift]; img_ref/out_ref: (tr, tc).
    x = img_ref[...].astype(jnp.float32)
    ss = ss_ref[...]
    y = x * ss[:, 0:1] + ss[:, 1:2]
    out_ref[...] = y.astype(out_ref.dtype)


def _norm_lanestats_kernel(ss_ref, img_ref, out_ref):
    # ss_ref: (2, tc) f32 -> per-element [scale; shift]; img_ref/out_ref: (tr, tc).
    x = img_ref[...].astype(jnp.float32)
    y = x * ss_ref[0:1, :] + ss_ref[1:2, :]
    out_ref[...] = y.astype(out_ref.dtype)


def normalization(img, mean, std):
    """(img - mean.view(-1,1,1)) / std.view(-1,1,1), img in NCHW."""
    N, C, H, W = img.shape
    hw = H * W
    itemsize = jnp.dtype(img.dtype).itemsize

    # Per-channel affine params in f32:  (x - mean)/std == x*(1/std) + (-mean/std).
    mean_f32 = mean.reshape(-1).astype(jnp.float32)        # (C,)
    inv_std = 1.0 / std.reshape(-1).astype(jnp.float32)    # (C,)
    shift_c = -mean_f32 * inv_std                          # (C,)

    phys_vmem = _physical_vmem_bytes()
    target_bytes = (6 << 20) if phys_vmem >= (128 << 20) else (4 << 20)
    vmem_cap = (64 << 20) if phys_vmem >= (128 << 20) else (48 << 20)

    if hw % 128 == 0:
        # Layout A: (N*C, H*W), lane-dense rows with per-row stats.
        rows, cols = N * C, hw
        img2 = img.reshape(rows, cols)
        ss = jnp.broadcast_to(
            jnp.stack([inv_std, shift_c], axis=-1)[None], (N, C, 2)
        ).reshape(rows, 2)
        tr, tc = _choose_tiles(rows, cols, itemsize, target_bytes)
        kernel = _norm_rowstats_kernel
        ss_spec = pl.BlockSpec((tr, 2), lambda i, j: (i, 0))
        stats_tile_bytes = _round_up(tr, 8) * 128 * 4          # lane-padded to 128
    else:
        # Layout B (H*W not a multiple of 128): (N, C*H*W) with per-element stats.
        rows, cols = N, C * hw
        img2 = img.reshape(rows, cols)
        ss = jnp.stack([jnp.repeat(inv_std, hw), jnp.repeat(shift_c, hw)], axis=0)
        tr, tc = _choose_tiles(rows, cols, itemsize, target_bytes)
        kernel = _norm_lanestats_kernel
        ss_spec = pl.BlockSpec((2, tc), lambda i, j: (0, j))
        stats_tile_bytes = 8 * _round_up(tc, 128) * 4          # sublane-padded to 8

    grid = (_cdiv(rows, tr), _cdiv(cols, tc))
    tile_bytes = _round_up(tr, 8) * _round_up(tc, 128) * itemsize

    # Double-buffered (in + out + stats) tiles plus headroom, capped per chip.
    vmem_need = 2 * (2 * tile_bytes + stats_tile_bytes) + (4 << 20)
    vmem_limit = int(min(vmem_cap, max(vmem_need, 16 << 20)))

    out2 = pl.pallas_call(
        kernel,
        out_shape=jax.ShapeDtypeStruct((rows, cols), img.dtype),
        grid_spec=pl.GridSpec(
            grid=grid,
            in_specs=[
                ss_spec,                                       # packed [scale, shift]
                pl.BlockSpec((tr, tc), lambda i, j: (i, j)),   # img tile
            ],
            out_specs=pl.BlockSpec((tr, tc), lambda i, j: (i, j)),
        ),
        compiler_params=pltpu.CompilerParams(
            dimension_semantics=("parallel", "parallel"),
            vmem_limit_bytes=vmem_limit,
        ),
    )(ss, img2)

    return out2.reshape(N, C, H, W)


if __name__ == "__main__":
    key = jax.random.PRNGKey(0)
    # Deterministic per-channel statistics (ImageNet-style constants).
    mean = jnp.array([0.485, 0.456, 0.406, 0.5], dtype=jnp.float32)
    std = jnp.array([0.229, 0.224, 0.225, 0.25], dtype=jnp.float32)

    # Lane-dense path (H*W multiple of 128).
    N, C, H, W = 2, 4, 16, 16
    img = jax.random.uniform(key, (N, C, H, W), dtype=jnp.float32)
    out = jax.block_until_ready(normalization(img, mean, std))
    ref = (img - mean.reshape(-1, 1, 1)) / std.reshape(-1, 1, 1)
    assert out.shape == (N, C, H, W)
    assert jnp.allclose(out, ref, atol=1e-5, rtol=1e-5)

    # Fallback path (H*W not a multiple of 128, e.g. 7x7 feature maps).
    N2, C2, H2, W2 = 2, 4, 7, 7
    img_small = jax.random.uniform(jax.random.PRNGKey(0), (N2, C2, H2, W2),
                                   dtype=jnp.float32)
    out_small = jax.block_until_ready(normalization(img_small, mean, std))
    ref_small = (img_small - mean.reshape(-1, 1, 1)) / std.reshape(-1, 1, 1)
    assert jnp.allclose(out_small, ref_small, atol=1e-5, rtol=1e-5)

    print("KERNEL_OK")
</pallas_src>

<mosaic_0001>
module attributes {stable_mosaic.version = 11 : i64} {
  func.func @_norm_rowstats_kernel(%arg0: i32, %arg1: i32, %arg2: memref<8x2xf32, #tpu.memory_space<vmem>>, %arg3: memref<8x256xf32, #tpu.memory_space<vmem>>, %arg4: memref<8x256xf32, #tpu.memory_space<vmem>>) attributes {dimension_semantics = [#tpu.dimension_semantics<parallel>, #tpu.dimension_semantics<parallel>], iteration_bounds = array<i64: 1, 1>, scalar_prefetch = 0 : i64, scratch_operands = 0 : i64, tpu.core_type = #tpu.core_type<tc>, window_params = [{transform_indices = @transform_0, window_bounds = array<i64: 8, 2>}, {transform_indices = @transform_1, window_bounds = array<i64: 8, 256>}, {transform_indices = @transform_2, window_bounds = array<i64: 8, 256>}]} {
    %c0 = arith.constant 0 : index
    %c0_0 = arith.constant 0 : index
    %0 = vector.load %arg3[%c0, %c0_0] : memref<8x256xf32, #tpu.memory_space<vmem>>, vector<8x256xf32>
    %c0_1 = arith.constant 0 : index
    %c0_2 = arith.constant 0 : index
    %1 = vector.load %arg2[%c0_1, %c0_2] : memref<8x2xf32, #tpu.memory_space<vmem>>, vector<8x2xf32>
    %2 = vector.extract_strided_slice %1 {offsets = [0, 0], sizes = [8, 1], strides = [1, 1]} : vector<8x2xf32> to vector<8x1xf32>
    %3 = vector.broadcast %2 : vector<8x1xf32> to vector<8x256xf32>
    %4 = arith.mulf %0, %3 : vector<8x256xf32>
    %5 = vector.extract_strided_slice %1 {offsets = [0, 1], sizes = [8, 1], strides = [1, 1]} : vector<8x2xf32> to vector<8x1xf32>
    %6 = vector.broadcast %5 : vector<8x1xf32> to vector<8x256xf32>
    %7 = arith.addf %4, %6 : vector<8x256xf32>
    %c0_3 = arith.constant 0 : index
    %c0_4 = arith.constant 0 : index
    %8 = vector.load %arg4[%c0_3, %c0_4] : memref<8x256xf32, #tpu.memory_space<vmem>>, vector<8x256xf32>
    tpu.vector_store %arg4[%c0_3, %c0_4], %7 {strides = array<i32>} : memref<8x256xf32, #tpu.memory_space<vmem>>, vector<8x256xf32>,
    return
  }
  func.func @transform_0(%arg0: i32, %arg1: i32) -> (i32, i32) {
    %c0_i32 = arith.constant 0 : i32
    %c0_i32_0 = arith.constant 0 : i32
    return %arg0, %c0_i32 : i32, i32
  }
  func.func @transform_1(%arg0: i32, %arg1: i32) -> (i32, i32) {
    %c0_i32 = arith.constant 0 : i32
    return %arg0, %arg1 : i32, i32
  }
  func.func @transform_2(%arg0: i32, %arg1: i32) -> (i32, i32) {
    %c0_i32 = arith.constant 0 : i32
    return %arg0, %arg1 : i32, i32
  }
}

</mosaic_0001>

<llo_original>
// kernel: tpu_custom_call.1
$region0: #{tpu_custom_call.1}
  #allocation0 [shape = 'u32[]', space=smem, size = 0x4, offset = 0x4, fixed_abs, tag = 'smem constant byte address 0x4 - core index']
  #allocation1 [shape = 'u32[72,128]{1,0:T(1,128)}', space=vmem, size = 0x9000, scoped, tag = 'internal scratch']
  %s0 = inlined_call_operand.vmem [shape: f32[8,2], index: 0, kind: input, shape index: {}]
  %s1 = inlined_call_operand.hbm [shape: f32[8,256], index: 1, kind: input, shape index: {}]
  %s2 = inlined_call_operand.hbm [shape: f32[8,256], index: 2, kind: output, shape index: {}]
  %s3 = sld [smem:[#allocation0]]
  $region22: #{tpu_custom_call.1} parent=0
    _
  %s5 = ssub.s32 1, %s3
  %s6 = scalar_select 0, %s5, %s3
  $region1: #{tpu_custom_call.1} parent=0
    #allocation2 [shape = 'u8[8192]{0}', space=vmem, size = 0x2000, scoped, tag = 'input window, operand 1, single buffered']
    #allocation3 [shape = 's32[1]{0}', space=sflag, size = 0x4, scoped, tag = 'scoped memory for tpu_custom_call.1']
    #allocation4 [shape = 's32[1]{0}', space=sflag, size = 0x4, scoped, tag = 'scoped memory for tpu_custom_call.1']
    #allocation5 [shape = 'u8[8192]{0}', space=vmem, size = 0x2000, scoped, tag = 'output window, operand 0, single buffered']
    %7 = vsyncpa [#allocation3], 0
    %8 = vsyncpa [#allocation4], 0
    // Predicated region
    $region2: #{tpu_custom_call.1} parent=1 // pred_check
      _
    $region3: #{tpu_custom_call.1} parent=1 // pred_check_branch
      %10 = sbr.rel (0) target = $region5
    $region4: #{tpu_custom_call.1} parent=1 // pred_region
      _
    $region5: #{tpu_custom_call.1} parent=1 // pred_fallthru
      _
    // Predicated region
    $region6: #{tpu_custom_call.1} parent=1 // pred_check
      _
    $region7: #{tpu_custom_call.1} parent=1 // pred_check_branch
      %12 = sbr.rel (0) target = $region9
    $region8: #{tpu_custom_call.1} parent=1 // pred_region
      %14 = vsyncadd [#allocation3], 0
      %s16 = sshll.u32 %s1, 4
      %s17 = int_to_ptr.hbm [resolvable:$true] %s16
      %s18 = sshll.u32 [#allocation2], 4
      %s19 = int_to_ptr.vmem [resolvable:$true] %s18
      %21 = dma.hbm_to_vmem [thread:$0]  %s17, 256, %s19, [#allocation3]
    $region9: #{tpu_custom_call.1} parent=1 // pred_fallthru
      _
    // Predicated region
    $region10: #{tpu_custom_call.1} parent=1 // pred_check
      _
    $region11: #{tpu_custom_call.1} parent=1 // pred_check_branch
      %23 = sbr.rel (0) target = $region13
    $region12: #{tpu_custom_call.1} parent=1 // pred_region
      %25 = dma.done [#allocation3], 256
    $region13: #{tpu_custom_call.1} parent=1 // pred_fallthru
      _
    %v26 = vld [vmem:[#allocation2] sm:$0xff]
    %v27 = vld [vmem:[#allocation2 + $0x8] sm:$0xff]
    %v28 = vld [vmem:[%s0] sm:$0xff]
    %30 = vset.pattern.permute.xlu0 0
    %31 = vperm.xlu0 %30, %v28
    %v32 = vpop.permute.xlu0 %31
    %v34 = vmul.f32 %v26, %v32
    %v35 = vmul.f32 %v27, %v32
    %36 = vset.pattern.permute.xlu0 1
    %37 = vperm.xlu0 %36, %v28
    %v38 = vpop.permute.xlu0 %37
    %v40 = vadd.f32 %v34, %v38
    %v41 = vadd.f32 %v35, %v38
    %42 = vst [vmem:[#allocation5] sm:$0xff] %v40
    %43 = vst [vmem:[#allocation5 + $0x8] sm:$0xff] %v41
    // Predicated region
    $region14: #{tpu_custom_call.1} parent=1 // pred_check
      _
    $region15: #{tpu_custom_call.1} parent=1 // pred_check_branch
      %45 = sbr.rel (0) target = $region17
    $region16: #{tpu_custom_call.1} parent=1 // pred_region
      %47 = vsyncadd [#allocation4], 0
      %s49 = sshll.u32 [#allocation5], 4
      %s50 = int_to_ptr.vmem [resolvable:$true] %s49
      %s51 = sshll.u32 %s2, 4
      %s52 = int_to_ptr.hbm [resolvable:$true] %s51
      %54 = dma.vmem_to_hbm [thread:$0]  %s50, 256, %s52, [#allocation4]
    $region17: #{tpu_custom_call.1} parent=1 // pred_fallthru
      _
    // Predicated region
    $region18: #{tpu_custom_call.1} parent=1 // pred_check
      _
    $region19: #{tpu_custom_call.1} parent=1 // pred_check_branch
      %56 = sbr.rel (0) target = $region21
    $region20: #{tpu_custom_call.1} parent=1 // pred_region
      %58 = dma.done [#allocation4], 256
    $region21: #{tpu_custom_call.1} parent=1 // pred_fallthru
      _
    %59 = vsyncpa [#allocation3], 1
    %60 = vsyncpa [#allocation4], 1

</llo_original>
